<compile_context>
chip_gen: v6e
topology: v6e:2x2x1
jax: 0.10.0
libtpu: 0.0.40
codegen_flags: <defaults>
</compile_context>

<pallas_src>
import jax
import jax.numpy as jnp
from jax.experimental import pallas as pl
from jax.experimental.pallas import tpu as pltpu


def _round_up(x: int, m: int) -> int:
    return ((x + m - 1) // m) * m


def _frame_tile_budget_bytes() -> int:
    """Per-buffer frame-tile budget (lane-padded bytes), by TPU generation."""
    kind = ""
    try:
        dev = jax.devices()[0]
        if dev.platform == "tpu":
            kind = dev.device_kind.lower()
    except Exception:
        pass
    if "7" in kind:
        return 12 << 20   # v7x: 64 MiB VMEM total, ~3.2 TB/s HBM -> big tiles
    if "6" in kind:
        return 10 << 20   # v6e: 128 MiB VMEM
    if "5" in kind:
        return 6 << 20    # v5e/v5p
    return 4 << 20        # unknown / interpret fallback


def _make_kernel(w0, w1, tb, tt, b_true, t_true, c_true, frame_dtype):
    inv_count = 1.0 / float(b_true * c_true)
    neg_fill = float(jnp.finfo(frame_dtype).min)   # finite, never wins a real max
    need_t_mask = (t_true % tt) != 0
    need_b_mask = (b_true % tb) != 0

    def kernel(logit_ref, frame_ref, target_ref, out_ref, max_ref):
        # Hoisted out of pl.when bodies (see compile-fix note above).
        b = pl.program_id(0)
        t = pl.program_id(1)
        nt = pl.num_programs(1)

        @pl.when(t == 0)
        def _():
            max_ref[...] = jnp.full(max_ref.shape, neg_fill, dtype=max_ref.dtype)

        tile = frame_ref[...]                                    # (TB, TT, C) native dtype
        if need_t_mask or need_b_mask:
            mask = None
            if need_t_mask:
                tpos = t * tt + jax.lax.broadcasted_iota(jnp.int32, tile.shape, 1)
                mask = tpos < t_true
            if need_b_mask:
                brow = b * tb + jax.lax.broadcasted_iota(jnp.int32, tile.shape, 0)
                bm = brow < b_true
                mask = bm if mask is None else jnp.logical_and(mask, bm)
            # Mask BEFORE the max so out-of-bounds block garbage (possibly NaN) never
            # reaches the running maximum.
            tile = jnp.where(mask, tile, neg_fill)

        # Running max over frame tiles, kept in the input dtype (max-then-cast).
        max_ref[...] = jnp.maximum(max_ref[...], jnp.max(tile, axis=1))

        # Finalize: BCE on the small (TB, C) tiles only, once per batch block.
        @pl.when(t == nt - 1)
        def _():
            x1 = logit_ref[...].astype(jnp.float32)              # clip-wise logits
            x2 = max_ref[...].astype(jnp.float32)                # max over frames
            y = jnp.clip(target_ref[...].astype(jnp.float32), 0.0, 1.0)   # smooth_eps = 0

            def bce(x):
                # numerically stable BCEWithLogits: max(x,0) - x*y + log1p(exp(-|x|))
                return jnp.maximum(x, 0.0) - x * y + jnp.log1p(jnp.exp(-jnp.abs(x)))

            combined = w0 * bce(x1) + w1 * bce(x2)               # (TB, C) f32

            if need_b_mask:
                row = b * tb + jax.lax.broadcasted_iota(jnp.int32, combined.shape, 0)
                combined = jnp.where(row < b_true, combined, 0.0)

            # Partial of the final weighted mean; summed over batch blocks in the wrapper.
            out_ref[0, 0] = jnp.sum(combined) * inv_count

    return kernel


def bce_2way_loss(input_dict, target, rating, weights=(1.0, 1.0),
                  tile_b=None, tile_t=None):
    # Defaults: use_rating=False, use_label_weight=False -> rating unused in forward math.
    del rating
    logit = input_dict["logit"]                # (B, C), native dtype (f32 or bf16)
    frame = input_dict["framewise_logit"]      # (B, T, C), native dtype

    B, C = logit.shape
    _, T, _ = frame.shape

    itemsize = jnp.dtype(frame.dtype).itemsize
    sub = 8 if itemsize >= 4 else (16 if itemsize == 2 else 32)   # packed sublane tile
    c_pad = _round_up(C, 128)                                     # lane-padded VMEM width

    # ---- tile sizes ----------------------------------------------------------------
    TB = tile_b if tile_b is not None else (8 if B >= 8 else B)
    if tile_t is not None:
        TT = tile_t
    else:
        budget = _frame_tile_budget_bytes()                       # padded bytes / buffer
        tt_max = max(sub, (budget // (TB * c_pad * itemsize)) // sub * sub)
        TT = T if T <= tt_max else tt_max                         # full T or multiple of sub

    nb = pl.cdiv(B, TB)
    nt = pl.cdiv(T, TT)

    # VMEM budget: double-buffered frame tile (lane-padded) + small logit/target/scratch.
    frame_buf = TB * TT * c_pad * itemsize
    small_buf = 6 * _round_up(TB, sub) * c_pad * 4
    vmem_limit = int(min(56 << 20, 2 * frame_buf + small_buf + (8 << 20)))

    kernel = _make_kernel(float(weights[0]), float(weights[1]),
                          TB, TT, B, T, C, frame.dtype)

    partial = pl.pallas_call(
        kernel,
        out_shape=jax.ShapeDtypeStruct((nb, 1), jnp.float32),
        grid_spec=pltpu.PrefetchScalarGridSpec(
            num_scalar_prefetch=0,
            grid=(nb, nt),
            in_specs=[
                pl.BlockSpec((TB, C), lambda b, t: (b, 0)),         # clip-wise logits
                pl.BlockSpec((TB, TT, C), lambda b, t: (b, t, 0)),  # frame-wise logits
                pl.BlockSpec((TB, C), lambda b, t: (b, 0)),         # targets
            ],
            out_specs=pl.BlockSpec((1, 1), lambda b, t: (b, 0),
                                   memory_space=pltpu.MemorySpace.SMEM),
            scratch_shapes=[pltpu.VMEM((TB, C), frame.dtype)],      # running-max accumulator
        ),
        compiler_params=pltpu.CompilerParams(
            dimension_semantics=("parallel", "arbitrary"),
            vmem_limit_bytes=vmem_limit),
    )(logit, frame, target)

    return jnp.sum(partial)


def _reference(input_dict, target, rating, weights=(1.0, 1.0)):
    # pure-JAX reference of the PyTorch forward (default flags)
    del rating

    def bce(x, y):
        y = jnp.clip(y, 0.0, 1.0)
        l = jnp.maximum(x, 0.0) - x * y + jnp.log1p(jnp.exp(-jnp.abs(x)))
        return jnp.mean(l)

    x1 = input_dict["logit"].astype(jnp.float32)
    x2 = jnp.max(input_dict["framewise_logit"].astype(jnp.float32), axis=1)
    t = target.astype(jnp.float32)
    return weights[0] * bce(x1, t) + weights[1] * bce(x2, t)


if __name__ == "__main__":
    B, T, C = 2, 8, 182  # small shapes; C matches the module's num_classes=182 default

    key = jax.random.PRNGKey(0)
    k1, k2, k3, k4 = jax.random.split(key, 4)
    logit = jax.random.normal(k1, (B, C), dtype=jnp.float32)
    framewise_logit = jax.random.normal(k2, (B, T, C), dtype=jnp.float32)
    target = (jax.random.uniform(k3, (B, C)) < 0.3).astype(jnp.float32)
    rating = jax.random.uniform(k4, (B,), dtype=jnp.float32)

    inputs = {"logit": logit, "framewise_logit": framewise_logit}

    out = jax.block_until_ready(bce_2way_loss(inputs, target, rating, weights=(1.0, 1.0)))
    ref = _reference(inputs, target, rating, weights=(1.0, 1.0))
    assert jnp.allclose(out, ref, atol=1e-5, rtol=1e-5), (out, ref)

    # bf16 inputs flow straight into the kernel (no host-side f32 copy of the big tensor);
    # the bf16 frame max is exact, BCE runs in f32 inside the kernel.
    inputs_bf16 = {
        "logit": logit.astype(jnp.bfloat16),
        "framewise_logit": framewise_logit.astype(jnp.bfloat16),
    }
    out_bf16 = jax.block_until_ready(
        bce_2way_loss(inputs_bf16, target, rating, weights=(1.0, 1.0)))
    ref_bf16 = _reference(inputs_bf16, target, rating, weights=(1.0, 1.0))
    assert jnp.allclose(out_bf16, ref_bf16, atol=1e-5, rtol=1e-5), (out_bf16, ref_bf16)

    # Ragged shapes (neither B nor T divides the tile) with small forced tiles: exercises
    # the in-kernel masking that replaced the wrapper-side jnp.pad of the frame tensor.
    B2, T2 = 10, 23
    j1, j2, j3 = jax.random.split(jax.random.PRNGKey(1), 3)
    inputs2 = {
        "logit": jax.random.normal(j1, (B2, C), dtype=jnp.float32),
        "framewise_logit": jax.random.normal(j2, (B2, T2, C), dtype=jnp.float32),
    }
    target2 = (jax.random.uniform(j3, (B2, C)) < 0.3).astype(jnp.float32)
    out2 = jax.block_until_ready(
        bce_2way_loss(inputs2, target2, None, weights=(1.0, 1.0), tile_b=8, tile_t=8))
    ref2 = _reference(inputs2, target2, None, weights=(1.0, 1.0))
    assert jnp.allclose(out2, ref2, atol=1e-5, rtol=1e-5), (out2, ref2)

    print("KERNEL_OK")
</pallas_src>

<mosaic_0001>
module attributes {stable_mosaic.version = 11 : i64} {
  func.func @kernel(%arg0: i32, %arg1: i32, %arg2: memref<2x182xf32, #tpu.memory_space<vmem>>, %arg3: memref<2x8x182xf32, #tpu.memory_space<vmem>>, %arg4: memref<2x182xf32, #tpu.memory_space<vmem>>, %arg5: memref<1x1xf32, #tpu.memory_space<smem>>, %arg6: memref<2x182xf32, #tpu.memory_space<vmem>>) attributes {dimension_semantics = [#tpu.dimension_semantics<parallel>, #tpu.dimension_semantics<arbitrary>], iteration_bounds = array<i64: 1, 1>, scalar_prefetch = 0 : i64, scratch_operands = 1 : i64, tpu.core_type = #tpu.core_type<tc>, window_params = [{transform_indices = @transform_0, window_bounds = array<i64: 2, 182>}, {transform_indices = @transform_1, window_bounds = array<i64: 2, 8, 182>}, {transform_indices = @transform_2, window_bounds = array<i64: 2, 182>}, {transform_indices = @transform_3, window_bounds = array<i64: 1, 1>}]} {
    %c0_i32 = arith.constant 0 : i32
    %0 = arith.cmpi eq, %arg1, %c0_i32 : i32
    %1 = arith.extui %0 : i1 to i32
    %c0_i32_0 = arith.constant 0 : i32
    %2 = arith.cmpi ne, %1, %c0_i32_0 : i32
    scf.if %2 {
      %cst_9 = arith.constant -3.40282347E+38 : f32
      %11 = vector.broadcast %cst_9 : f32 to vector<2x182xf32>
      %c0_10 = arith.constant 0 : index
      %c0_11 = arith.constant 0 : index
      %12 = vector.load %arg6[%c0_10, %c0_11] : memref<2x182xf32, #tpu.memory_space<vmem>>, vector<2x182xf32>
      tpu.vector_store %arg6[%c0_10, %c0_11], %11 {strides = array<i32>} : memref<2x182xf32, #tpu.memory_space<vmem>>, vector<2x182xf32>,
    } else {
    }
    %c0 = arith.constant 0 : index
    %c0_1 = arith.constant 0 : index
    %c0_2 = arith.constant 0 : index
    %3 = vector.load %arg3[%c0, %c0_1, %c0_2] : memref<2x8x182xf32, #tpu.memory_space<vmem>>, vector<2x8x182xf32>
    %c0_3 = arith.constant 0 : index
    %c0_4 = arith.constant 0 : index
    %4 = vector.load %arg6[%c0_3, %c0_4] : memref<2x182xf32, #tpu.memory_space<vmem>>, vector<2x182xf32>
    %cst = arith.constant dense<0xFF800000> : vector<2x182xf32>
    %5 = vector.multi_reduction <maximumf>, %3, %cst [1] : vector<2x8x182xf32> to vector<2x182xf32>
    %6 = arith.maximumf %4, %5 : vector<2x182xf32>
    %c0_5 = arith.constant 0 : index
    %c0_6 = arith.constant 0 : index
    %7 = vector.load %arg6[%c0_5, %c0_6] : memref<2x182xf32, #tpu.memory_space<vmem>>, vector<2x182xf32>
    tpu.vector_store %arg6[%c0_5, %c0_6], %6 {strides = array<i32>} : memref<2x182xf32, #tpu.memory_space<vmem>>, vector<2x182xf32>,
    %c0_i32_7 = arith.constant 0 : i32
    %8 = arith.cmpi eq, %arg1, %c0_i32_7 : i32
    %9 = arith.extui %8 : i1 to i32
    %c0_i32_8 = arith.constant 0 : i32
    %10 = arith.cmpi ne, %9, %c0_i32_8 : i32
    scf.if %10 {
      %c0_9 = arith.constant 0 : index
      %c0_10 = arith.constant 0 : index
      %11 = vector.load %arg2[%c0_9, %c0_10] : memref<2x182xf32, #tpu.memory_space<vmem>>, vector<2x182xf32>
      %c0_11 = arith.constant 0 : index
      %c0_12 = arith.constant 0 : index
      %12 = vector.load %arg6[%c0_11, %c0_12] : memref<2x182xf32, #tpu.memory_space<vmem>>, vector<2x182xf32>
      %c0_13 = arith.constant 0 : index
      %c0_14 = arith.constant 0 : index
      %13 = vector.load %arg4[%c0_13, %c0_14] : memref<2x182xf32, #tpu.memory_space<vmem>>, vector<2x182xf32>
      %cst_15 = arith.constant 0.000000e+00 : f32
      %cst_16 = arith.constant 1.000000e+00 : f32
      %14 = vector.broadcast %cst_15 : f32 to vector<2x182xf32>
      %15 = arith.maximumf %14, %13 : vector<2x182xf32>
      %16 = vector.broadcast %cst_16 : f32 to vector<2x182xf32>
      %17 = arith.minimumf %16, %15 : vector<2x182xf32>
      %cst_17 = arith.constant 0.000000e+00 : f32
      %18 = vector.broadcast %cst_17 : f32 to vector<2x182xf32>
      %19 = arith.maximumf %11, %18 : vector<2x182xf32>
      %20 = arith.mulf %11, %17 : vector<2x182xf32>
      %21 = arith.subf %19, %20 : vector<2x182xf32>
      %22 = math.absf %11 : vector<2x182xf32>
      %cst_18 = arith.constant 0.000000e+00 : f32
      %23 = vector.broadcast %cst_18 : f32 to vector<2x182xf32>
      %24 = arith.subf %23, %22 : vector<2x182xf32>
      %25 = math.exp %24 : vector<2x182xf32>
      %26 = math.log1p %25 : vector<2x182xf32>
      %27 = arith.addf %21, %26 : vector<2x182xf32>
      %cst_19 = arith.constant 1.000000e+00 : f32
      %28 = vector.broadcast %cst_19 : f32 to vector<2x182xf32>
      %29 = arith.mulf %28, %27 : vector<2x182xf32>
      %cst_20 = arith.constant 0.000000e+00 : f32
      %30 = vector.broadcast %cst_20 : f32 to vector<2x182xf32>
      %31 = arith.maximumf %12, %30 : vector<2x182xf32>
      %32 = arith.mulf %12, %17 : vector<2x182xf32>
      %33 = arith.subf %31, %32 : vector<2x182xf32>
      %34 = math.absf %12 : vector<2x182xf32>
      %cst_21 = arith.constant 0.000000e+00 : f32
      %35 = vector.broadcast %cst_21 : f32 to vector<2x182xf32>
      %36 = arith.subf %35, %34 : vector<2x182xf32>
      %37 = math.exp %36 : vector<2x182xf32>
      %38 = math.log1p %37 : vector<2x182xf32>
      %39 = arith.addf %33, %38 : vector<2x182xf32>
      %cst_22 = arith.constant 1.000000e+00 : f32
      %40 = vector.broadcast %cst_22 : f32 to vector<2x182xf32>
      %41 = arith.mulf %40, %39 : vector<2x182xf32>
      %42 = arith.addf %29, %41 : vector<2x182xf32>
      %43 = vector.shape_cast %42 : vector<2x182xf32> to vector<1x2x182xf32>
      %cst_23 = arith.constant dense<0.000000e+00> : vector<1xf32>
      %44 = vector.multi_reduction <add>, %43, %cst_23 [1, 2] : vector<1x2x182xf32> to vector<1xf32>
      %45 = vector.shape_cast %44 : vector<1xf32> to vector<1x1x1xf32>
      %46 = vector.extract %45[0, 0, 0] : f32 from vector<1x1x1xf32>
      %cst_24 = arith.constant 0.00274725282 : f32
      %47 = arith.mulf %46, %cst_24 : f32
      %c0_25 = arith.constant 0 : index
      %c0_26 = arith.constant 0 : index
      %48 = memref.load %arg5[%c0_25, %c0_26] : memref<1x1xf32, #tpu.memory_space<smem>>
      memref.store %47, %arg5[%c0_25, %c0_26] : memref<1x1xf32, #tpu.memory_space<smem>>
    } else {
    }
    return
  }
  func.func @transform_0(%arg0: i32, %arg1: i32) -> (i32, i32) {
    %c0_i32 = arith.constant 0 : i32
    %c0_i32_0 = arith.constant 0 : i32
    return %arg0, %c0_i32 : i32, i32
  }
  func.func @transform_1(%arg0: i32, %arg1: i32) -> (i32, i32, i32) {
    %c0_i32 = arith.constant 0 : i32
    %c0_i32_0 = arith.constant 0 : i32
    return %arg0, %arg1, %c0_i32 : i32, i32, i32
  }
  func.func @transform_2(%arg0: i32, %arg1: i32) -> (i32, i32) {
    %c0_i32 = arith.constant 0 : i32
    %c0_i32_0 = arith.constant 0 : i32
    return %arg0, %c0_i32 : i32, i32
  }
  func.func @transform_3(%arg0: i32, %arg1: i32) -> (i32, i32) {
    %c0_i32 = arith.constant 0 : i32
    %c0_i32_0 = arith.constant 0 : i32
    return %arg0, %c0_i32 : i32, i32
  }
}

</mosaic_0001>

<llo_original>
// kernel: tpu_custom_call.1
$region0: #{tpu_custom_call.1}
  #allocation0 [shape = 'u32[]', space=smem, size = 0x4, offset = 0x4, fixed_abs, tag = 'smem constant byte address 0x4 - core index']
  #allocation1 [shape = 'u32[144,128]{1,0:T(1,128)}', space=vmem, size = 0x12000, scoped, tag = 'internal scratch']
  #allocation2 [shape = 'f32[2,182]{1,0:T(2,128)}', space=vmem, size = 0x800, scoped, tag = 'scratch operand']
  %s0 = inlined_call_operand.hbm [shape: f32[2,182], index: 0, kind: input, shape index: {}]
  %s1 = inlined_call_operand.hbm [shape: f32[2,8,182], index: 1, kind: input, shape index: {}]
  %s2 = inlined_call_operand.hbm [shape: f32[2,182], index: 2, kind: input, shape index: {}]
  %s3 = inlined_call_operand.hbm [shape: f32[1,1], index: 3, kind: output, shape index: {}]
  %s4 = sld [smem:[#allocation0]]
  $region42: #{tpu_custom_call.1} parent=0
    _
  %s6 = ssub.s32 1, %s4
  %s7 = scalar_select 0, %s6, %s4
  $region1: #{tpu_custom_call.1} parent=0
    #allocation3 [shape = 'u8[2048]{0}', space=vmem, size = 0x800, scoped, tag = 'input window, operand 0, single buffered']
    #allocation4 [shape = 's32[1]{0}', space=sflag, size = 0x4, scoped, tag = 'scoped memory for tpu_custom_call.1']
    #allocation5 [shape = 's32[1]{0}', space=sflag, size = 0x4, scoped, tag = 'scoped memory for tpu_custom_call.1']
    #allocation6 [shape = 'u8[16384]{0}', space=vmem, size = 0x4000, scoped, tag = 'input window, operand 1, single buffered']
    #allocation7 [shape = 's32[1]{0}', space=sflag, size = 0x4, scoped, tag = 'scoped memory for tpu_custom_call.1']
    #allocation8 [shape = 'u8[2048]{0}', space=vmem, size = 0x800, scoped, tag = 'input window, operand 2, single buffered']
    #allocation9 [shape = 'u8[512]{0}', space=smem, size = 0x200, scoped, tag = 'output window, operand 0, single buffered']
    %8 = vsyncpa [#allocation4], 0
    %9 = vsyncpa [#allocation7], 0
    %10 = vsyncpa [#allocation5], 0
    // Predicated region
    $region2: #{tpu_custom_call.1} parent=1 // pred_check
      _
    $region3: #{tpu_custom_call.1} parent=1 // pred_check_branch
      %12 = sbr.rel (0) target = $region5
    $region4: #{tpu_custom_call.1} parent=1 // pred_region
      %s14 = ssub.s32 64, 64
      %15 = vsyncadd [#allocation4], %s14
      %s17 = sshll.u32 [#allocation3], 4
      %s18 = int_to_ptr.vmem [resolvable:$true] %s17
      %20 = dma.hbm_to_vmem [thread:$0]  %s0, 64, %s18, [#allocation4]
    $region5: #{tpu_custom_call.1} parent=1 // pred_fallthru
      _
    // Predicated region
    $region6: #{tpu_custom_call.1} parent=1 // pred_check
      _
    $region7: #{tpu_custom_call.1} parent=1 // pred_check_branch
      %22 = sbr.rel (0) target = $region9
    $region8: #{tpu_custom_call.1} parent=1 // pred_region
      %s24 = ssub.s32 512, 512
      %25 = vsyncadd [#allocation7], %s24
      %s26 = sshll.u32 [#allocation6], 4
      %s27 = int_to_ptr.vmem [resolvable:$true] %s26
      %32 = dma.hbm_to_vmem [thread:$0]  %s1, 512, %s27, [#allocation7], 256, 256, 16
    $region9: #{tpu_custom_call.1} parent=1 // pred_fallthru
      _
    // Predicated region
    $region10: #{tpu_custom_call.1} parent=1 // pred_check
      _
    $region11: #{tpu_custom_call.1} parent=1 // pred_check_branch
      %34 = sbr.rel (0) target = $region13
    $region12: #{tpu_custom_call.1} parent=1 // pred_region
      %s36 = ssub.s32 64, 64
      %37 = vsyncadd [#allocation7], %s36
      %s39 = sshll.u32 [#allocation8], 4
      %s40 = int_to_ptr.vmem [resolvable:$true] %s39
      %42 = dma.hbm_to_vmem [thread:$0]  %s2, 64, %s40, [#allocation7]
    $region13: #{tpu_custom_call.1} parent=1 // pred_fallthru
      _
    // Predicated region
    $region14: #{tpu_custom_call.1} parent=1 // pred_check
      _
    $region15: #{tpu_custom_call.1} parent=1 // pred_check_branch
      %44 = sbr.rel (0) target = $region17
    $region16: #{tpu_custom_call.1} parent=1 // pred_region
      %45 = dma.done [#allocation4], 64
    $region17: #{tpu_custom_call.1} parent=1 // pred_fallthru
      _
    // Predicated region
    $region18: #{tpu_custom_call.1} parent=1 // pred_check
      _
    $region19: #{tpu_custom_call.1} parent=1 // pred_check_branch
      %47 = sbr.rel (0) target = $region21
    $region20: #{tpu_custom_call.1} parent=1 // pred_region
      %48 = dma.done [#allocation7], 512
    $region21: #{tpu_custom_call.1} parent=1 // pred_fallthru
      _
    // Predicated region
    $region22: #{tpu_custom_call.1} parent=1 // pred_check
      _
    $region23: #{tpu_custom_call.1} parent=1 // pred_check_branch
      %50 = sbr.rel (0) target = $region25
    $region24: #{tpu_custom_call.1} parent=1 // pred_region
      %51 = dma.done [#allocation7], 64
    $region25: #{tpu_custom_call.1} parent=1 // pred_fallthru
      _
    %p52 = scmp.eq.s32.totalorder 0, 0
    // Predicated region
    $region26: #{tpu_custom_call.1} parent=1 // pred_check
      %p53 = pneg %p52
    $region27: #{tpu_custom_call.1} parent=1 // pred_check_branch
      %55 = sbr.rel (%p53) target = $region29
    $region28: #{tpu_custom_call.1} parent=1 // pred_region
      %vm56 = vcmask 1041408
      %vm57 = vcmask 437250
      %vm58 = vmor %vm57, %vm56
      %59 = vst.msk [vmem:[#allocation2] sm:$0xf] %vm58, -3.4028235e+38
    $region29: #{tpu_custom_call.1} parent=1 // pred_fallthru
      _
    %v60 = vld [vmem:[#allocation6] sm:$0xff]
    %v61 = vld [vmem:[#allocation6 + $0x8] sm:$0xff]
    %v62 = vld [vmem:[#allocation6 + $0x10] sm:$0xff]
    %v63 = vld [vmem:[#allocation6 + $0x18] sm:$0xff]
    %v64 = vld [vmem:[#allocation2] sm:$0xf]
    %v65 = vrot.slane %v60, 4
    %v66 = vmax.f32 %v60, %v65
    %v67 = vrot.slane %v66, 2
    %v68 = vmax.f32 %v66, %v67
    %v69 = vrot.slane %v68, 1
    %v70 = vmax.f32 %v68, %v69
    %vm71 = vcmask 441344
    %v72 = vsel %vm71, %v61, -inf
    %v73 = vrot.slane %v72, 4
    %v74 = vmax.f32 %v72, %v73
    %v75 = vrot.slane %v74, 2
    %v76 = vmax.f32 %v74, %v75
    %v77 = vrot.slane %v76, 1
    %v78 = vmax.f32 %v76, %v77
    %v79 = vrot.slane %v62, 4
    %v80 = vmax.f32 %v62, %v79
    %v81 = vrot.slane %v80, 2
    %v82 = vmax.f32 %v80, %v81
    %v83 = vrot.slane %v82, 1
    %v84 = vmax.f32 %v82, %v83
    %v85 = vsel %vm71, %v63, -inf
    %v86 = vrot.slane %v85, 4
    %v87 = vmax.f32 %v85, %v86
    %v88 = vrot.slane %v87, 2
    %v89 = vmax.f32 %v87, %v88
    %v90 = vrot.slane %v89, 1
    %v91 = vmax.f32 %v89, %v90
    %v96 = vcombine.low %v70, %v78
    %v98 = vunpack.c.l.s4 1983009808
    %v99 = vunpack.c.0.s8 %v98
    %v100 = vlaneseq
    %v101 = vshrl.u32 %v100, 7
    %v102 = vsub.s32 %v99, %v101
    %v103 = vrot.slane %v96, %v102
    %v104 = vcombine.low %v84, %v91
    %v106 = vunpack.c.l.s4 1983009808
    %v107 = vunpack.c.0.s8 %v106
    %v108 = vlaneseq
    %v109 = vshrl.u32 %v108, 7
    %v110 = vsub.s32 %v107, %v109
    %v111 = vrot.slane %v104, %v110
    %vm112 = vcmask 1044484
    %v113 = vsel %vm112, %v103, %v103
    %vm114 = vcmask 1046534
    %v115 = vsel %vm114, %v103, %v113
    %v116 = vrot.slane %v111, 7
    %vm117 = vcmask 1041409
    %v118 = vsel %vm117, %v116, %v115
    %vm119 = vcmask 1043459
    %v120 = vsel %vm119, %v116, %v118
    %vm121 = vcmask 1045509
    %v122 = vsel %vm121, %v116, %v120
    %vm123 = vcmask 1047559
    %v124 = vsel %vm123, %v116, %v122
    %v126 = vmax.f32 %v64, %v124
    %vm127 = vcmask 1041408
    %vm128 = vcmask 437250
    %vm129 = vmor %vm128, %vm127
    %130 = vst.msk [vmem:[#allocation2] sm:$0xf] %vm129, %v126
    // Predicated region
    $region30: #{tpu_custom_call.1} parent=1 // pred_check
      %p131 = pneg %p52
    $region31: #{tpu_custom_call.1} parent=1 // pred_check_branch
      %133 = sbr.rel (%p131) target = $region33
    $region32: #{tpu_custom_call.1} parent=1 // pred_region
      %v134 = vld [vmem:[#allocation3] sm:$0xf]
      %v135 = vld [vmem:[#allocation2] sm:$0xf]
      %v136 = vld [vmem:[#allocation8] sm:$0xf]
      %v137 = vmax.f32 %v136, 0.0
      %v138 = vmin.f32 %v137, 1.0
      %v139 = vmax.f32 %v134, 0.0
      %v140 = vmul.f32 %v134, %v138
      %v141 = vsub.f32 %v139, %v140
      %v142 = vand.u32 2147483647, %v134
      %v143 = vsub.f32 0.0, %v142
      %v144 = vmul.f32 %v143, 1.442695
      %v145 = vpow.pop %v144
      %v146 = vadd.f32 %v145, 1.0
      %v147 = vlog2.pop %v146
      %v148 = vmul.f32 %v147, 0.6931472
      %v149 = vmul.f32 -0.5, %v145
      %v150 = vadd.f32 %v149, 1.0
      %v151 = vmul.f32 %v150, %v145
      %v152 = vand.u32 2147483647, %v145
      %vm153 = vcmp.lt.f32.partialorder %v152, 0.0004427343
      %v154 = vsel %vm153, %v151, %v148
      %v155 = vadd.f32 %v141, %v154
      %v156 = vmax.f32 %v135, 0.0
      %v157 = vmul.f32 %v135, %v138
      %v158 = vsub.f32 %v156, %v157
      %v159 = vand.u32 2147483647, %v135
      %v160 = vsub.f32 0.0, %v159
      %v161 = vmul.f32 %v160, 1.442695
      %v162 = vpow.pop %v161
      %v163 = vadd.f32 %v162, 1.0
      %v164 = vlog2.pop %v163
      %v165 = vmul.f32 %v164, 0.6931472
      %v166 = vmul.f32 -0.5, %v162
      %v167 = vadd.f32 %v166, 1.0
      %v168 = vmul.f32 %v167, %v162
      %v169 = vand.u32 2147483647, %v162
      %vm170 = vcmp.lt.f32.partialorder %v169, 0.0004427343
      %v171 = vsel %vm170, %v168, %v165
      %v172 = vadd.f32 %v158, %v171
      %v173 = vadd.f32 %v155, %v172
      %v176 = vunpack.c.l.s4 1983009808
      %v177 = vunpack.c.0.s8 %v176
      %v178 = vlaneseq
      %v179 = vshrl.u32 %v178, 7
      %v180 = vsub.s32 %v177, %v179
      %v181 = vrot.slane %v173, %v180
      %v182 = vcombine.high %v181, %v181
      %v185 = vsel %vm127, %v181, 0.0
      %vm186 = vcmask 435200
      %v187 = vsel %vm186, %v182, 0.0
      %v188 = vadd.f32 %v185, %v187
      %189 = vadd.xlane.f32.xlu0 %v188
      %v190 = vpop.xlane.xlu0 %189
      %v191 = vrot.slane %v190, 4
      %v192 = vadd.f32 %v190, %v191
      %v193 = vrot.slane %v192, 2
      %v194 = vadd.f32 %v192, %v193
      %v195 = vrot.slane %v194, 1
      %v196 = vadd.f32 %v194, %v195
      %s197 = vtos %v196
      %s198 = smul.f32 %s197, 0.0027472528
      %s199 = scalar_lea.smem [#allocation9], 0
      %200 = sst [smem:[%s199]] %s198
    $region33: #{tpu_custom_call.1} parent=1 // pred_fallthru
      _
    // Predicated region
    $region34: #{tpu_custom_call.1} parent=1 // pred_check
      _
    $region35: #{tpu_custom_call.1} parent=1 // pred_check_branch
      %202 = sbr.rel (0) target = $region37
    $region36: #{tpu_custom_call.1} parent=1 // pred_region
      %s204 = ssub.s32 16, 16
      %205 = vsyncadd [#allocation5], %s204
      %208 = dma.smem_to_hbm [#allocation9], 16, %s3, [#allocation5]
    $region37: #{tpu_custom_call.1} parent=1 // pred_fallthru
      _
    // Predicated region
    $region38: #{tpu_custom_call.1} parent=1 // pred_check
      _
    $region39: #{tpu_custom_call.1} parent=1 // pred_check_branch
      %210 = sbr.rel (0) target = $region41
    $region40: #{tpu_custom_call.1} parent=1 // pred_region
      %211 = dma.done [#allocation5], 16
    $region41: #{tpu_custom_call.1} parent=1 // pred_fallthru
      _
    %212 = sfence
    %213 = vsyncpa [#allocation4], 1
    %214 = vsyncpa [#allocation7], 1
    %215 = vsyncpa [#allocation5], 1

</llo_original>
